<compile_context>
chip_gen: v7x
topology: tpu7x:2x2x1
jax: 0.10.0
libtpu: 0.0.40
codegen_flags: <defaults>
</compile_context>

<pallas_src>
import math

import jax
import jax.numpy as jnp
from jax.experimental import pallas as pl
from jax.experimental.pallas import tpu as pltpu


def _cdiv(a, b):
    return -(-a // b)


def _round_up(x, m):
    return _cdiv(x, m) * m


def _vmem_capacity_bytes():
    """Physical VMEM of the local TPU generation.  Falls back to 64 MiB (the
    v7x floor) so tile selection is always safe on any generation."""
    try:
        return int(pltpu.get_tpu_info().vmem_capacity_bytes)
    except Exception:
        return 64 << 20


def _largest_aligned_divisor(total, cap, unit):
    """Largest multiple of `unit` that divides `total` and is <= min(cap, total)."""
    cap = min(cap, total)
    best, t = unit, unit
    while t <= cap:
        if total % t == 0:
            best = t
        t += unit
    return best


# ----------------------------------------------------------------------------
# Kernels
# ----------------------------------------------------------------------------
def _linear_tanh_kernel(x_ref, w_ref, b_ref, o_ref):
    """Single-K-tile fast path: one (M,K)x(K,N) MXU matmul + fused epilogue."""
    acc = jnp.dot(x_ref[...].astype(w_ref.dtype), w_ref[...],
                  preferred_element_type=jnp.float32)
    o_ref[...] = jnp.tanh(acc + b_ref[...]).astype(o_ref.dtype)


def _linear_tanh_kernel_ksplit(x_ref, w_ref, b_ref, o_ref, acc_ref):
    """K (in_features) is the innermost grid reduction axis; f32 accumulator."""
    k = pl.program_id(2)

    @pl.when(k == 0)
    def _init():
        acc_ref[...] = jnp.zeros_like(acc_ref)

    acc_ref[...] += jnp.dot(x_ref[...].astype(w_ref.dtype), w_ref[...],
                            preferred_element_type=jnp.float32)

    @pl.when(k == pl.num_programs(2) - 1)
    def _finalize():
        # bias add + tanh epilogue in f32 (EUP), cast on the final store.
        o_ref[...] = jnp.tanh(acc_ref[...] + b_ref[...]).astype(o_ref.dtype)


# ----------------------------------------------------------------------------
# One-time parameter preparation (NOT per forward call)
# ----------------------------------------------------------------------------
def prepare_params(weight, bias=None, *, compute_dtype=None):
    """Transpose PyTorch (out_f, in_f) weight to (in_f, out_f) and zero-pad
    both feature dims to lane-dense multiples of 128.  Call once at init time.

    compute_dtype: optional MXU input dtype (e.g. jnp.bfloat16) for the
    stored weight; the kernel casts x tiles to match.  Accumulation is f32.
    """
    out_f, in_f = weight.shape
    if bias is None:
        bias = jnp.zeros((out_f,), dtype=weight.dtype)
    in_f_pad = _round_up(in_f, 128)
    out_f_pad = _round_up(out_f, 128)

    w_t = weight.T                                   # (in_f, out_f)
    if (in_f_pad, out_f_pad) != (in_f, out_f):
        w_t = jnp.pad(w_t, ((0, in_f_pad - in_f), (0, out_f_pad - out_f)))
    if compute_dtype is not None:
        w_t = w_t.astype(compute_dtype)

    b_row = bias.astype(jnp.float32)
    if out_f_pad != out_f:
        b_row = jnp.pad(b_row, (0, out_f_pad - out_f))
    b_row = b_row.reshape(1, out_f_pad)
    return w_t, b_row, (in_f, out_f)


# ----------------------------------------------------------------------------
# Forward
# ----------------------------------------------------------------------------
def linear_tanh(x, w_t, b_row, features, *, block_b=None, block_n=None,
                block_k=None, input_buffering=None, interpret=False):
    """tanh(x @ W.T + b) with params pre-prepared by prepare_params().

    x:        (B, in_features)
    w_t:      (in_f_pad, out_f_pad)   -- transposed + padded weight
    b_row:    (1, out_f_pad)          -- f32 padded bias row
    features: (in_features, out_features)
    """
    in_f, out_f = features
    B = x.shape[0]
    assert x.shape[1] == in_f, "weight / input feature mismatch"
    in_f_pad, out_f_pad = w_t.shape

    x_item = jnp.dtype(x.dtype).itemsize
    w_item = jnp.dtype(w_t.dtype).itemsize
    out_item = jnp.dtype(x.dtype).itemsize

    vmem_cap = _vmem_capacity_bytes()
    tile_budget = int(0.40 * vmem_cap)      # resident (double-buffered) budget
    sub = 8 if x_item >= 4 else (16 if x_item == 2 else 32)

    # ---- batch tiling: near-equal sublane-aligned tiles, <= 512 rows -------
    if block_b is None:
        n_b = max(1, _cdiv(B, 512))
        block_b = min(_round_up(_cdiv(B, n_b), sub), _round_up(B, sub))
    else:
        block_b = min(_round_up(block_b, sub), _round_up(B, sub))
    n_b = _cdiv(B, block_b)
    B_pad = n_b * block_b

    # ---- N / K tiling (always 128-aligned divisors of the padded dims) -----
    block_n = _largest_aligned_divisor(out_f_pad, block_n or 512, 128)
    block_k = _largest_aligned_divisor(in_f_pad, block_k or in_f_pad, 128)

    def footprint(bb, bn, bk):
        # 2x-buffered x & W input tiles + 2x output tile + f32 acc + bias tile
        return (2 * bb * bk * x_item + 2 * bk * bn * w_item
                + 2 * bb * bn * out_item + bb * bn * 4 + 2 * bn * 4)

    while footprint(block_b, block_n, block_k) > tile_budget and block_k > 128:
        block_k = _largest_aligned_divisor(in_f_pad, block_k // 2, 128)
    while footprint(block_b, block_n, block_k) > tile_budget and block_n > 128:
        block_n = _largest_aligned_divisor(out_f_pad, block_n // 2, 128)
    while footprint(block_b, block_n, block_k) > tile_budget and block_b > sub:
        block_b = _round_up(block_b // 2, sub)
        n_b = _cdiv(B, block_b)
        B_pad = n_b * block_b

    # ---- v7x megacore: make sure both TensorCores get a parallel tile ------
    if n_b * _cdiv(out_f_pad, block_n) == 1:
        if out_f_pad % 256 == 0:
            block_n = out_f_pad // 2
        elif B > sub:
            block_b = _round_up(_cdiv(B, 2), sub)
            n_b = _cdiv(B, block_b)
            B_pad = n_b * block_b

    grid_b = n_b
    grid_n = out_f_pad // block_n
    grid_k = in_f_pad // block_k
    use_ksplit = grid_k > 1

    # ---- pad x only when needed (zeros are matmul-neutral) -----------------
    if (B_pad, in_f_pad) != (B, in_f):
        x_p = jnp.pad(x, ((0, B_pad - B), (0, in_f_pad - in_f)))
    else:
        x_p = x

    cost = pl.CostEstimate(
        flops=2 * B_pad * in_f_pad * out_f_pad,
        transcendentals=B_pad * out_f_pad,
        bytes_accessed=(x_p.size * x_item * grid_n       # x re-read per N tile
                        + w_t.size * w_item * grid_b     # W re-read per B tile
                        + b_row.size * 4 * grid_b * grid_n
                        + B_pad * out_f_pad * out_item),
    )

    vmem_limit = int(min(0.85 * vmem_cap,
                         max(32 << 20,
                             2 * footprint(block_b, block_n, block_k) + (8 << 20))))

    def _in_spec(shape, imap):
        if input_buffering:
            return pl.BlockSpec(shape, imap,
                                pipeline_mode=pl.Buffered(input_buffering))
        return pl.BlockSpec(shape, imap)

    if use_ksplit:
        grid = (grid_b, grid_n, grid_k)
        in_specs = [
            _in_spec((block_b, block_k), lambda i, j, k: (i, k)),
            _in_spec((block_k, block_n), lambda i, j, k: (k, j)),
            pl.BlockSpec((1, block_n), lambda i, j, k: (0, j)),
        ]
        out_specs = pl.BlockSpec((block_b, block_n), lambda i, j, k: (i, j))
        scratch = [pltpu.VMEM((block_b, block_n), jnp.float32)]
        kernel = _linear_tanh_kernel_ksplit
        dims = ("parallel", "parallel", "arbitrary")
    else:
        grid = (grid_b, grid_n)
        in_specs = [
            _in_spec((block_b, block_k), lambda i, j: (i, 0)),
            _in_spec((block_k, block_n), lambda i, j: (0, j)),
            pl.BlockSpec((1, block_n), lambda i, j: (0, j)),
        ]
        out_specs = pl.BlockSpec((block_b, block_n), lambda i, j: (i, j))
        scratch = []
        kernel = _linear_tanh_kernel
        dims = ("parallel", "parallel")

    out = pl.pallas_call(
        kernel,
        out_shape=jax.ShapeDtypeStruct((B_pad, out_f_pad), x.dtype),
        grid_spec=pltpu.PrefetchScalarGridSpec(
            num_scalar_prefetch=0,
            grid=grid,
            in_specs=in_specs,
            out_specs=out_specs,
            scratch_shapes=scratch,
        ),
        compiler_params=pltpu.CompilerParams(
            dimension_semantics=dims,
            vmem_limit_bytes=vmem_limit,
        ),
        cost_estimate=cost,
        interpret=interpret,
    )(x_p, w_t, b_row)

    if (B_pad, out_f_pad) != (B, out_f):
        out = out[:B, :out_f]
    return out


def linear_tanh_torch_layout(x, weight, bias=None, **kw):
    """One-shot convenience: accepts PyTorch nn.Linear (out_f, in_f) params.
    Prefer prepare_params() + linear_tanh() so W/b prep isn't paid per call."""
    w_t, b_row, feats = prepare_params(weight, bias)
    return linear_tanh(x, w_t, b_row, feats, **kw)


def init_params(key, in_features, out_features, dtype=jnp.float32):
    """Deterministic re-creation of the module's reset_parameters()."""
    kw, kb = jax.random.split(key)
    weight = jax.random.uniform(
        kw, (out_features, in_features), dtype=dtype,
        minval=-0.0005, maxval=0.0005)
    fan_in = in_features
    bound = 1.0 / math.sqrt(fan_in) if fan_in > 0 else 0.0
    bias = jax.random.uniform(
        kb, (out_features,), dtype=dtype, minval=-bound, maxval=bound)
    return weight, bias


if __name__ == "__main__":
    key = jax.random.PRNGKey(0)
    k_x, k_p = jax.random.split(key)

    batch = 8
    in_features = 32
    out_features = 32

    x = jax.random.normal(k_x, (batch, in_features), dtype=jnp.float32)
    weight, bias = init_params(k_p, in_features, out_features)

    # One-time parameter prep (transpose + lane-dense pad), then forward.
    w_t, b_row, feats = prepare_params(weight, bias)
    out = jax.block_until_ready(linear_tanh(x, w_t, b_row, feats))

    # Sanity check against plain-JAX reference.
    ref = jnp.tanh(x @ weight.T + bias)
    assert out.shape == (batch, out_features)
    assert jnp.allclose(out, ref, atol=1e-5, rtol=1e-5)

    print("KERNEL_OK")
</pallas_src>

<mosaic_0001>
module attributes {stable_mosaic.version = 11 : i64} {
  func.func @_linear_tanh_kernel(%arg0: i32, %arg1: i32, %arg2: memref<8x128xf32, #tpu.memory_space<vmem>>, %arg3: memref<128x128xf32, #tpu.memory_space<vmem>>, %arg4: memref<1x128xf32, #tpu.memory_space<vmem>>, %arg5: memref<8x128xf32, #tpu.memory_space<vmem>>) attributes {dimension_semantics = [#tpu.dimension_semantics<parallel>, #tpu.dimension_semantics<parallel>], iteration_bounds = array<i64: 1, 1>, scalar_prefetch = 0 : i64, scratch_operands = 0 : i64, tpu.core_type = #tpu.core_type<tc>, window_params = [{transform_indices = @transform_0, window_bounds = array<i64: 8, 128>}, {transform_indices = @transform_1, window_bounds = array<i64: 128, 128>}, {transform_indices = @transform_2, window_bounds = array<i64: 1, 128>}, {transform_indices = @transform_3, window_bounds = array<i64: 8, 128>}]} {
    %c0 = arith.constant 0 : index
    %c0_0 = arith.constant 0 : index
    %0 = vector.load %arg2[%c0, %c0_0] : memref<8x128xf32, #tpu.memory_space<vmem>>, vector<8x128xf32>
    %c0_1 = arith.constant 0 : index
    %c0_2 = arith.constant 0 : index
    %1 = vector.load %arg3[%c0_1, %c0_2] : memref<128x128xf32, #tpu.memory_space<vmem>>, vector<128x128xf32>
    %cst = arith.constant dense<0.000000e+00> : vector<8x128xf32>
    %2 = tpu.matmul %0, %1, %cst {dimension_numbers = #tpu.dot_dimension_numbers<[1], [0], [0], [1], [0, 0, 1, 1], [], []>} : vector<8x128xf32>, vector<128x128xf32>, vector<8x128xf32> -> vector<8x128xf32>
    %c0_3 = arith.constant 0 : index
    %c0_4 = arith.constant 0 : index
    %3 = vector.load %arg4[%c0_3, %c0_4] : memref<1x128xf32, #tpu.memory_space<vmem>>, vector<1x128xf32>
    %4 = vector.broadcast %3 : vector<1x128xf32> to vector<8x128xf32>
    %5 = arith.addf %2, %4 : vector<8x128xf32>
    %6 = math.tanh %5 : vector<8x128xf32>
    %c0_5 = arith.constant 0 : index
    %c0_6 = arith.constant 0 : index
    %7 = vector.load %arg5[%c0_5, %c0_6] : memref<8x128xf32, #tpu.memory_space<vmem>>, vector<8x128xf32>
    tpu.vector_store %arg5[%c0_5, %c0_6], %6 {strides = array<i32>} : memref<8x128xf32, #tpu.memory_space<vmem>>, vector<8x128xf32>,
    return
  }
  func.func @transform_0(%arg0: i32, %arg1: i32) -> (i32, i32) {
    %c0_i32 = arith.constant 0 : i32
    %c0_i32_0 = arith.constant 0 : i32
    return %arg0, %c0_i32 : i32, i32
  }
  func.func @transform_1(%arg0: i32, %arg1: i32) -> (i32, i32) {
    %c0_i32 = arith.constant 0 : i32
    %c0_i32_0 = arith.constant 0 : i32
    return %c0_i32, %arg1 : i32, i32
  }
  func.func @transform_2(%arg0: i32, %arg1: i32) -> (i32, i32) {
    %c0_i32 = arith.constant 0 : i32
    %c0_i32_0 = arith.constant 0 : i32
    return %c0_i32, %arg1 : i32, i32
  }
  func.func @transform_3(%arg0: i32, %arg1: i32) -> (i32, i32) {
    %c0_i32 = arith.constant 0 : i32
    return %arg0, %arg1 : i32, i32
  }
}

</mosaic_0001>

<llo_original>
// kernel: tpu_custom_call.1
$region0: #{tpu_custom_call.1}
  #allocation0 [shape = 'u32[]', space=smem, size = 0x4, offset = 0x4, fixed_abs, tag = 'smem constant byte address 0x4 - core index']
  #allocation1 [shape = 'u32[144,128]{1,0:T(1,128)}', space=vmem, size = 0x12000, scoped, tag = 'internal scratch']
  %s0 = inlined_call_operand.hbm [shape: f32[8,128], index: 0, kind: input, shape index: {}]
  %s1 = inlined_call_operand.hbm [shape: f32[128,128], index: 1, kind: input, shape index: {}]
  %s2 = inlined_call_operand.vmem [shape: f32[1,128], index: 2, kind: input, shape index: {}]
  %s3 = inlined_call_operand.hbm [shape: f32[8,128], index: 3, kind: output, shape index: {}]
  %s4 = sld [smem:[#allocation0]]
  $region30: #{tpu_custom_call.1} parent=0
    _
  %s6 = ssub.s32 1, %s4
  %s7 = scalar_select 0, %s6, %s4
  $region1: #{tpu_custom_call.1} parent=0
    #allocation2 [shape = 'u8[4096]{0}', space=vmem, size = 0x1000, scoped, tag = 'input window, operand 0, single buffered']
    #allocation3 [shape = 's32[1]{0}', space=sflag, size = 0x4, scoped, tag = 'scoped memory for tpu_custom_call.1']
    #allocation4 [shape = 's32[1]{0}', space=sflag, size = 0x4, scoped, tag = 'scoped memory for tpu_custom_call.1']
    #allocation5 [shape = 'u8[65536]{0}', space=vmem, size = 0x10000, scoped, tag = 'input window, operand 1, single buffered']
    #allocation6 [shape = 's32[1]{0}', space=sflag, size = 0x4, scoped, tag = 'scoped memory for tpu_custom_call.1']
    #allocation7 [shape = 'u8[4096]{0}', space=vmem, size = 0x1000, scoped, tag = 'output window, operand 0, single buffered']
    %8 = vsyncpa [#allocation3], 0
    %9 = vsyncpa [#allocation6], 0
    %10 = vsyncpa [#allocation4], 0
    // Predicated region
    $region2: #{tpu_custom_call.1} parent=1 // pred_check
      _
    $region3: #{tpu_custom_call.1} parent=1 // pred_check_branch
      %12 = sbr.rel (0) target = $region5
    $region4: #{tpu_custom_call.1} parent=1 // pred_region
      %s14 = ssub.s32 128, 128
      %15 = vsyncadd [#allocation3], %s14
      %s17 = sshll.u32 [#allocation2], 4
      %s18 = int_to_ptr.vmem [resolvable:$true] %s17
      %20 = dma.hbm_to_vmem [thread:$0]  %s0, 128, %s18, [#allocation3]
    $region5: #{tpu_custom_call.1} parent=1 // pred_fallthru
      _
    // Predicated region
    $region6: #{tpu_custom_call.1} parent=1 // pred_check
      _
    $region7: #{tpu_custom_call.1} parent=1 // pred_check_branch
      %22 = sbr.rel (0) target = $region9
    $region8: #{tpu_custom_call.1} parent=1 // pred_region
      %s24 = ssub.s32 2048, 2048
      %25 = vsyncadd [#allocation6], %s24
      %s26 = sshll.u32 [#allocation5], 4
      %s27 = int_to_ptr.vmem [resolvable:$true] %s26
      %32 = dma.hbm_to_vmem [thread:$0]  %s1, 2048, %s27, [#allocation6], 128, 128, 8
    $region9: #{tpu_custom_call.1} parent=1 // pred_fallthru
      _
    // Predicated region
    $region10: #{tpu_custom_call.1} parent=1 // pred_check
      _
    $region11: #{tpu_custom_call.1} parent=1 // pred_check_branch
      %34 = sbr.rel (0) target = $region13
    $region12: #{tpu_custom_call.1} parent=1 // pred_region
      _
    $region13: #{tpu_custom_call.1} parent=1 // pred_fallthru
      _
    // Predicated region
    $region14: #{tpu_custom_call.1} parent=1 // pred_check
      _
    $region15: #{tpu_custom_call.1} parent=1 // pred_check_branch
      %36 = sbr.rel (0) target = $region17
    $region16: #{tpu_custom_call.1} parent=1 // pred_region
      %37 = dma.done [#allocation3], 128
    $region17: #{tpu_custom_call.1} parent=1 // pred_fallthru
      _
    // Predicated region
    $region18: #{tpu_custom_call.1} parent=1 // pred_check
      _
    $region19: #{tpu_custom_call.1} parent=1 // pred_check_branch
      %39 = sbr.rel (0) target = $region21
    $region20: #{tpu_custom_call.1} parent=1 // pred_region
      %40 = dma.done [#allocation6], 2048
    $region21: #{tpu_custom_call.1} parent=1 // pred_fallthru
      _
    %v41 = vld [vmem:[#allocation2] sm:$0xff]
    %v42 = vld [vmem:[#allocation5] sm:$0xff]
    %v43 = vld [vmem:[#allocation5 + $0x8] sm:$0xff]
    %v44 = vld [vmem:[#allocation5 + $0x10] sm:$0xff]
    %v45 = vld [vmem:[#allocation5 + $0x18] sm:$0xff]
    %v46 = vld [vmem:[#allocation5 + $0x20] sm:$0xff]
    %v47 = vld [vmem:[#allocation5 + $0x28] sm:$0xff]
    %v48 = vld [vmem:[#allocation5 + $0x30] sm:$0xff]
    %v49 = vld [vmem:[#allocation5 + $0x38] sm:$0xff]
    %v50 = vld [vmem:[#allocation5 + $0x40] sm:$0xff]
    %v51 = vld [vmem:[#allocation5 + $0x48] sm:$0xff]
    %v52 = vld [vmem:[#allocation5 + $0x50] sm:$0xff]
    %v53 = vld [vmem:[#allocation5 + $0x58] sm:$0xff]
    %v54 = vld [vmem:[#allocation5 + $0x60] sm:$0xff]
    %v55 = vld [vmem:[#allocation5 + $0x68] sm:$0xff]
    %v56 = vld [vmem:[#allocation5 + $0x70] sm:$0xff]
    %v57 = vld [vmem:[#allocation5 + $0x78] sm:$0xff]
    %v58 = vld [vmem:[%s2] sm:$0x1]
    %v60 = vlaneseq
    %v61 = vshrl.u32 %v60, 7
    %v62 = vsub.s32 0, %v61
    %v63 = vrot.slane %v58, %v62
    %65 = vmatprep.subr.mxu0 0.0
    %66 = vmatpush1.msra.mxu0 %v42
    %67 = vmatprep.subr.mxu0 0.0
    %68 = vmatpush1.msra.mxu0 %v43
    %69 = vmatprep.subr.mxu0 0.0
    %70 = vmatpush1.msra.mxu0 %v44
    %71 = vmatprep.subr.mxu0 0.0
    %72 = vmatpush1.msra.mxu0 %v45
    %73 = vmatprep.subr.mxu0 0.0
    %74 = vmatpush1.msra.mxu0 %v46
    %75 = vmatprep.subr.mxu0 0.0
    %76 = vmatpush1.msra.mxu0 %v47
    %77 = vmatprep.subr.mxu0 0.0
    %78 = vmatpush1.msra.mxu0 %v48
    %79 = vmatprep.subr.mxu0 0.0
    %80 = vmatpush1.msra.mxu0 %v49
    %81 = vmatprep.subr.mxu0 0.0
    %82 = vmatpush1.msra.mxu0 %v50
    %83 = vmatprep.subr.mxu0 0.0
    %84 = vmatpush1.msra.mxu0 %v51
    %85 = vmatprep.subr.mxu0 0.0
    %86 = vmatpush1.msra.mxu0 %v52
    %87 = vmatprep.subr.mxu0 0.0
    %88 = vmatpush1.msra.mxu0 %v53
    %89 = vmatprep.subr.mxu0 0.0
    %90 = vmatpush1.msra.mxu0 %v54
    %91 = vmatprep.subr.mxu0 0.0
    %92 = vmatpush1.msra.mxu0 %v55
    %93 = vmatprep.subr.mxu0 0.0
    %94 = vmatpush1.msra.mxu0 %v56
    %95 = vmatprep.subr.mxu0 0.0
    %96 = vmatpush1.msra.mxu0 %v57
    %97 = vmatprep.subr.mxu0 0.0
    %98 = vmatpush1.msra.mxu0 0.0
    %99 = vmatprep.subr.mxu0 0.0
    %100 = vmatpush1.msra.mxu0 0.0
    %101 = vmatprep.subr.mxu0 0.0
    %102 = vmatpush1.msra.mxu0 0.0
    %103 = vmatprep.subr.mxu0 0.0
    %104 = vmatpush1.msra.mxu0 0.0
    %105 = vmatprep.subr.mxu0 0.0
    %106 = vmatpush1.msra.mxu0 0.0
    %107 = vmatprep.subr.mxu0 0.0
    %108 = vmatpush1.msra.mxu0 0.0
    %109 = vmatprep.subr.mxu0 0.0
    %110 = vmatpush1.msra.mxu0 0.0
    %111 = vmatprep.subr.mxu0 0.0
    %112 = vmatpush1.msra.mxu0 0.0
    %113 = vmatprep.subr.mxu0 0.0
    %114 = vmatpush1.msra.mxu0 0.0
    %115 = vmatprep.subr.mxu0 0.0
    %116 = vmatpush1.msra.mxu0 0.0
    %117 = vmatprep.subr.mxu0 0.0
    %118 = vmatpush1.msra.mxu0 0.0
    %119 = vmatprep.subr.mxu0 0.0
    %120 = vmatpush1.msra.mxu0 0.0
    %121 = vmatprep.subr.mxu0 0.0
    %122 = vmatpush1.msra.mxu0 0.0
    %123 = vmatprep.subr.mxu0 0.0
    %124 = vmatpush1.msra.mxu0 0.0
    %125 = vmatprep.subr.mxu0 0.0
    %126 = vmatpush1.msra.mxu0 0.0
    %127 = vmatprep.subr.mxu0 0.0
    %128 = vmatpush1.msra.mxu0 0.0
    %129 = vmatprep.mubr.f32.mxu0 0.0
    %130 = vmatmul.mubr.f32.gmra.mrb[0].mxu0 %v41
    %v131 = vpop.f32.mrb[0].mxu0
    %v132 = vadd.f32 %v63, %v131
    %v133 = vpop.f32.mrb[0].mxu0
    %134 = vdwg.mxu0
    %v135 = vtanh.pop %v132
    %136 = vst [vmem:[#allocation7] sm:$0xff] %v135
    // Predicated region
    $region22: #{tpu_custom_call.1} parent=1 // pred_check
      _
    $region23: #{tpu_custom_call.1} parent=1 // pred_check_branch
      %138 = sbr.rel (0) target = $region25
    $region24: #{tpu_custom_call.1} parent=1 // pred_region
      %s140 = ssub.s32 128, 128
      %141 = vsyncadd [#allocation4], %s140
      %s143 = sshll.u32 [#allocation7], 4
      %s144 = int_to_ptr.vmem [resolvable:$true] %s143
      %146 = dma.vmem_to_hbm [thread:$0]  %s144, 128, %s3, [#allocation4]
    $region25: #{tpu_custom_call.1} parent=1 // pred_fallthru
      _
    // Predicated region
    $region26: #{tpu_custom_call.1} parent=1 // pred_check
      _
    $region27: #{tpu_custom_call.1} parent=1 // pred_check_branch
      %148 = sbr.rel (0) target = $region29
    $region28: #{tpu_custom_call.1} parent=1 // pred_region
      %149 = dma.done [#allocation4], 128
    $region29: #{tpu_custom_call.1} parent=1 // pred_fallthru
      _
    %150 = vsyncpa [#allocation3], 1
    %151 = vsyncpa [#allocation6], 1
    %152 = vsyncpa [#allocation4], 1

</llo_original>
